<compile_context>
chip_gen: v5e
topology: v5e:2x2
jax: 0.10.0
libtpu: 0.0.40
codegen_flags: <defaults>
</compile_context>

<pallas_src>
import jax
import jax.numpy as jnp
from jax.experimental import pallas as pl
from jax.experimental.pallas import tpu as pltpu


def _round_up(x, m):
    return ((x + m - 1) // m) * m


def _dart_rank_kernel(e_col_ref, e_row_ref, out_ref):
    """Accumulate per-row sums of max(e_k - e_i, 0) over column blocks."""
    @pl.when(pl.program_id(1) == 0)
    def _():
        out_ref[...] = jnp.zeros_like(out_ref)

    # ranked[i, k] = max(e_k - e_i, 0): one sub + one max on the N^2 path,
    # then an XLU lane reduce (different VLIW slot than the VALU -> ~free).
    ranked = jnp.maximum(e_row_ref[...] - e_col_ref[...], 0.0)      # (TM, TN)
    out_ref[...] += jnp.sum(ranked, axis=-1, keepdims=True)         # (TM, 1)


def dart_rank_loss_pallas(log_h, durations, events, alpha, beta,
                          *, tm=256, tn=4096):
    """Pallas implementation of dart_rank_loss. Returns a scalar f32."""
    n = durations.shape[0]
    theta = log_h.astype(jnp.float32).reshape(n, 1)
    dur = durations.astype(jnp.float32).reshape(n, 1)
    ev = events.astype(jnp.float32).reshape(n)

    # O(N) precompute (plain XLA): e = -(theta - log(dur + eps)).
    e = jnp.log(dur + 1e-32) - theta                                # (n, 1)

    # Tile sizes: TM multiple of 8 (sublane), TN multiple of 128 (lane-dense).
    TM = min(int(tm), _round_up(n, 8))
    TN = min(int(tn), _round_up(n, 128))
    # v7x megacore: make sure the "parallel" i axis has >= 2 blocks when
    # possible so both TensorCores get work (no effect on v5e/v6e).
    if _round_up(n, TM) // TM < 2 and n > 8:
        TM = _round_up((n + 1) // 2, 8)

    n_r = _round_up(n, TM)
    n_c = _round_up(n, TN)
    gi = n_r // TM
    gj = n_c // TN

    # Row padding is harmless (padded rows are dropped by the event weighting
    # in the wrapper); column padding uses -1e30 so max(e_pad - e_i, 0) == 0.
    e_col = jnp.pad(e, ((0, n_r - n), (0, 0)))                      # (n_r, 1)
    e_row = jnp.pad(e.reshape(1, n), ((0, 0), (0, n_c - n)),
                    constant_values=-1e30)                          # (1, n_c)

    row_sums = pl.pallas_call(
        _dart_rank_kernel,
        out_shape=jax.ShapeDtypeStruct((n_r, 1), jnp.float32),
        grid=(gi, gj),
        in_specs=[
            pl.BlockSpec((TM, 1), lambda i, j: (i, 0)),   # e column strip
            pl.BlockSpec((1, TN), lambda i, j: (0, j)),   # e row strip
        ],
        out_specs=pl.BlockSpec((TM, 1), lambda i, j: (i, 0)),
        compiler_params=pltpu.CompilerParams(
            dimension_semantics=("parallel", "arbitrary")),
    )(e_col, e_row)

    # O(N) epilogue in the wrapper: event weighting, 1/n^2 scale, penalties.
    loss = jnp.sum(row_sums[:n, 0] * ev) * (1.0 / (n * n))
    penalty_1 = jnp.sum(e * e) * (float(alpha) / n)
    penalty_2 = jnp.sum(theta * theta) * (float(beta) / n)
    return loss + penalty_1 + penalty_2


class DARTRankLoss:
    """JAX/Pallas analogue of the PyTorch DARTRankLoss module."""

    def __init__(self, alpha, beta):
        self.alpha = alpha
        self.beta = beta

    def __call__(self, log_h, durations, events):
        return dart_rank_loss_pallas(log_h, durations, events, self.alpha, self.beta)


def dart_rank_loss_ref(theta, durations, events, alpha, beta):
    """Pure-JAX reference mirroring the torch code exactly (for validation)."""
    n = durations.shape[0]
    theta = theta.reshape(n, 1)
    e = -(theta - jnp.log(durations.reshape(-1, 1) + 1e-32))
    d = e - e.reshape(-1)
    loss = jnp.sum(jnp.abs(d * (d <= 0)) * events.reshape(-1, 1)) * (1.0 / n ** 2)
    penalty_1 = jnp.sum(e ** 2) / n * alpha
    penalty_2 = jnp.sum(theta ** 2) / n * beta
    return loss + penalty_1 + penalty_2


if __name__ == "__main__":
    key = jax.random.PRNGKey(0)

    def make_inputs(k, n):
        k1, k2, k3 = jax.random.split(k, 3)
        log_h = jax.random.normal(k1, (n, 1), dtype=jnp.float32)
        durations = jax.random.uniform(k2, (n,), minval=0.5, maxval=5.0,
                                       dtype=jnp.float32)
        events = (jax.random.uniform(k3, (n,)) > 0.3).astype(jnp.float32)
        return log_h, durations, events

    alpha, beta = 0.1, 0.05
    loss_fn = DARTRankLoss(alpha, beta)

    # Small single-tile case (matches the module's typical tiny-batch usage).
    k0, k1 = jax.random.split(key)
    log_h, durations, events = make_inputs(k0, 8)
    loss = jax.block_until_ready(loss_fn(log_h, durations, events))
    ref = dart_rank_loss_ref(log_h, durations, events, alpha, beta)
    assert jnp.allclose(loss, ref, rtol=1e-5, atol=1e-5), (float(loss), float(ref))

    # Multi-tile case exercising the 2-D grid / accumulator path with small tiles.
    log_h2, durations2, events2 = make_inputs(k1, 300)
    loss2 = jax.block_until_ready(
        dart_rank_loss_pallas(log_h2, durations2, events2, alpha, beta,
                              tm=64, tn=128))
    ref2 = dart_rank_loss_ref(log_h2, durations2, events2, alpha, beta)
    assert jnp.allclose(loss2, ref2, rtol=1e-4, atol=1e-4), (float(loss2), float(ref2))

    # Default (large-tile) config on the same multi-tile data.
    loss3 = jax.block_until_ready(
        dart_rank_loss_pallas(log_h2, durations2, events2, alpha, beta))
    assert jnp.allclose(loss3, ref2, rtol=1e-4, atol=1e-4), (float(loss3), float(ref2))

    print("KERNEL_OK")
</pallas_src>

<mosaic_0001>
module attributes {stable_mosaic.version = 11 : i64} {
  func.func @_dart_rank_kernel(%arg0: i32, %arg1: i32, %arg2: memref<8x1xf32, #tpu.memory_space<vmem>>, %arg3: memref<1x128xf32, #tpu.memory_space<vmem>>, %arg4: memref<8x1xf32, #tpu.memory_space<vmem>>) attributes {dimension_semantics = [#tpu.dimension_semantics<parallel>, #tpu.dimension_semantics<arbitrary>], iteration_bounds = array<i64: 1, 1>, scalar_prefetch = 0 : i64, scratch_operands = 0 : i64, tpu.core_type = #tpu.core_type<tc>, window_params = [{transform_indices = @transform_0, window_bounds = array<i64: 8, 1>}, {transform_indices = @transform_1, window_bounds = array<i64: 1, 128>}, {transform_indices = @transform_2, window_bounds = array<i64: 8, 1>}]} {
    %c0_i32 = arith.constant 0 : i32
    %0 = arith.cmpi eq, %arg1, %c0_i32 : i32
    %1 = arith.extui %0 : i1 to i32
    %c0_i32_0 = arith.constant 0 : i32
    %2 = arith.cmpi ne, %1, %c0_i32_0 : i32
    scf.if %2 {
      %cst_9 = arith.constant 0.000000e+00 : f32
      %15 = vector.broadcast %cst_9 : f32 to vector<8x1xf32>
      %c0_10 = arith.constant 0 : index
      %c0_11 = arith.constant 0 : index
      %16 = vector.load %arg4[%c0_10, %c0_11] : memref<8x1xf32, #tpu.memory_space<vmem>>, vector<8x1xf32>
      tpu.vector_store %arg4[%c0_10, %c0_11], %15 {strides = array<i32>} : memref<8x1xf32, #tpu.memory_space<vmem>>, vector<8x1xf32>,
    } else {
    }
    %c0 = arith.constant 0 : index
    %c0_1 = arith.constant 0 : index
    %3 = vector.load %arg3[%c0, %c0_1] : memref<1x128xf32, #tpu.memory_space<vmem>>, vector<1x128xf32>
    %c0_2 = arith.constant 0 : index
    %c0_3 = arith.constant 0 : index
    %4 = vector.load %arg2[%c0_2, %c0_3] : memref<8x1xf32, #tpu.memory_space<vmem>>, vector<8x1xf32>
    %5 = vector.broadcast %3 : vector<1x128xf32> to vector<8x128xf32>
    %6 = vector.broadcast %4 : vector<8x1xf32> to vector<8x128xf32>
    %7 = arith.subf %5, %6 : vector<8x128xf32>
    %cst = arith.constant 0.000000e+00 : f32
    %8 = vector.broadcast %cst : f32 to vector<8x128xf32>
    %9 = arith.maximumf %7, %8 : vector<8x128xf32>
    %c0_4 = arith.constant 0 : index
    %c0_5 = arith.constant 0 : index
    %10 = vector.load %arg4[%c0_4, %c0_5] : memref<8x1xf32, #tpu.memory_space<vmem>>, vector<8x1xf32>
    %cst_6 = arith.constant dense<0.000000e+00> : vector<8xf32>
    %11 = vector.multi_reduction <add>, %9, %cst_6 [1] : vector<8x128xf32> to vector<8xf32>
    %12 = vector.shape_cast %11 : vector<8xf32> to vector<8x1xf32>
    %13 = arith.addf %10, %12 : vector<8x1xf32>
    %c0_7 = arith.constant 0 : index
    %c0_8 = arith.constant 0 : index
    %14 = vector.load %arg4[%c0_7, %c0_8] : memref<8x1xf32, #tpu.memory_space<vmem>>, vector<8x1xf32>
    tpu.vector_store %arg4[%c0_7, %c0_8], %13 {strides = array<i32>} : memref<8x1xf32, #tpu.memory_space<vmem>>, vector<8x1xf32>,
    return
  }
  func.func @transform_0(%arg0: i32, %arg1: i32) -> (i32, i32) {
    %c0_i32 = arith.constant 0 : i32
    %c0_i32_0 = arith.constant 0 : i32
    return %arg0, %c0_i32 : i32, i32
  }
  func.func @transform_1(%arg0: i32, %arg1: i32) -> (i32, i32) {
    %c0_i32 = arith.constant 0 : i32
    %c0_i32_0 = arith.constant 0 : i32
    return %c0_i32, %arg1 : i32, i32
  }
  func.func @transform_2(%arg0: i32, %arg1: i32) -> (i32, i32) {
    %c0_i32 = arith.constant 0 : i32
    %c0_i32_0 = arith.constant 0 : i32
    return %arg0, %c0_i32 : i32, i32
  }
}

</mosaic_0001>

<llo_original>
// kernel: tpu_custom_call.1
$region0: #{tpu_custom_call.1}
  #allocation0 [shape = 'u32[]', space=smem, size = 0x4, offset = 0x4, fixed_abs, tag = 'smem constant byte address 0x4 - core index']
  #allocation1 [shape = 'u32[72,128]{1,0:T(1,128)}', space=vmem, size = 0x9000, scoped, tag = 'internal scratch']
  %s0 = inlined_call_operand.vmem [shape: f32[8,1], index: 0, kind: input, shape index: {}]
  %s1 = inlined_call_operand.vmem [shape: f32[1,128], index: 1, kind: input, shape index: {}]
  %s2 = inlined_call_operand.vmem [shape: f32[8,1], index: 2, kind: output, shape index: {}]
  %s3 = sld [smem:[#allocation0]]
  $region22: #{tpu_custom_call.1} parent=0
    _
  %s5 = ssub.s32 1, %s3
  %s6 = scalar_select 0, %s5, %s3
  // Predicated region
  $region2: #{tpu_custom_call.1} parent=0 // pred_check
    _
  $region3: #{tpu_custom_call.1} parent=0 // pred_check_branch
    %8 = sbr.rel (0) target = $region5
  $region4: #{tpu_custom_call.1} parent=0 // pred_region
    _
  $region5: #{tpu_custom_call.1} parent=0 // pred_fallthru
    _
  // Predicated region
  $region6: #{tpu_custom_call.1} parent=0 // pred_check
    _
  $region7: #{tpu_custom_call.1} parent=0 // pred_check_branch
    %10 = sbr.rel (0) target = $region9
  $region8: #{tpu_custom_call.1} parent=0 // pred_region
    _
  $region9: #{tpu_custom_call.1} parent=0 // pred_fallthru
    _
  %p11 = scmp.eq.s32.totalorder 0, 0
  // Predicated region
  $region10: #{tpu_custom_call.1} parent=0 // pred_check
    %p12 = pneg %p11
  $region11: #{tpu_custom_call.1} parent=0 // pred_check_branch
    %14 = sbr.rel (%p12) target = $region13
  $region12: #{tpu_custom_call.1} parent=0 // pred_region
    %vm15 = vcmask 7168
    %16 = vst.msk [vmem:[%s2] sm:$0xff] %vm15, 0.0
  $region13: #{tpu_custom_call.1} parent=0 // pred_fallthru
    _
  %v17 = vld [vmem:[%s1] sm:$0x1]
  %v18 = vld [vmem:[%s0] sm:$0xff]
  %v20 = vperm.slane %v17, 0
  %23 = vset.pattern.permute.xlu0 0
  %24 = vperm.xlu0 %23, %v18
  %v25 = vpop.permute.xlu0 %24
  %v27 = vsub.f32 %v20, %v25
  %v28 = vmax.f32 %v27, 0.0
  %v29 = vld [vmem:[%s2] sm:$0xff]
  %30 = vadd.xlane.f32.xlu0 %v28
  %v31 = vpop.xlane.xlu0 %30
  %v32 = vadd.f32 %v29, %v31
  %vm33 = vcmask 7168
  %34 = vst.msk [vmem:[%s2] sm:$0xff] %vm33, %v32
  // Predicated region
  $region14: #{tpu_custom_call.1} parent=0 // pred_check
    _
  $region15: #{tpu_custom_call.1} parent=0 // pred_check_branch
    %36 = sbr.rel (0) target = $region17
  $region16: #{tpu_custom_call.1} parent=0 // pred_region
    _
  $region17: #{tpu_custom_call.1} parent=0 // pred_fallthru
    _
  // Predicated region
  $region18: #{tpu_custom_call.1} parent=0 // pred_check
    _
  $region19: #{tpu_custom_call.1} parent=0 // pred_check_branch
    %38 = sbr.rel (0) target = $region21
  $region20: #{tpu_custom_call.1} parent=0 // pred_region
    _
  $region21: #{tpu_custom_call.1} parent=0 // pred_fallthru
    _

</llo_original>
